<compile_context>
chip_gen: v7x
topology: tpu7x:2x2x1
jax: 0.10.0
libtpu: 0.0.40
codegen_flags: <defaults>
</compile_context>

<pallas_src>
import jax
import jax.numpy as jnp
from jax.experimental import pallas as pl
from jax.experimental.pallas import tpu as pltpu

# ---- problem sizes (small, consistent with the module) ----
E = 16      # extrinsic dim
D = 4       # intrinsic dim
HEN = 32    # encoder hidden
HDE = 32    # decoder hidden
HMU = 32    # drift-net hidden
HSG = 32    # diffusion-net hidden
N = 16      # demo batch

TB_MAX = 256          # batch tile cap (VMEM use ~2.2 KB/row -> far under budget)
LANES = 128           # param-slab lane width
ZW = HDE + HMU + HSG  # 96: width of fused z-projection slab
HID2W = HDE + D * D   # 48: width of fused second-layer output [aU1 | sflat]


def _rup8(r):
    return -(-r // 8) * 8


# ---- static row offsets of each parameter block inside the packed slab ----
R_W1T = 0                          # (E, HEN)      encoder layer-1 weight^T
R_B1 = R_W1T + _rup8(E)            # (1, HEN)      encoder layer-1 bias
R_ZCAT = R_B1 + _rup8(1)           # (HEN, ZW)     W2^T @ [U1^T | Wd1^T | Ws1^T]
R_BCAT = R_ZCAT + _rup8(HEN)       # (1, ZW)       b2 @ zcat + [c1 | bd1 | bs1]
R_BD2W = R_BCAT + _rup8(1)         # (ZW, HID2W)   0-pad / blockdiag(Wd2^T@U1^T, Ws2^T)
R_B2C = R_BD2W + _rup8(ZW)         # (1, HID2W)    [bd2 @ U1^T | bs2]
R_U2T = R_B2C + _rup8(1)           # (HDE, E)      U2^T
R_KU = R_U2T + _rup8(HDE)          # (HID2W, HDE*D)  0-pad / kron(U1, I_D)^T
R_SS = R_KU + _rup8(HID2W)         # (HDE*D, HDE)  block-sum^T
P_ROWS = R_SS + _rup8(HDE * D)     # total slab rows (376) -> ~192 KB f32


def drift_kernel(x_ref, p_ref, out_ref):
    f32 = jnp.float32
    x = x_ref[...]                                               # (TB, E)

    # static views into the packed parameter slab (zero-cost slices, lane 0 start)
    w1t = p_ref[R_W1T:R_W1T + E, 0:HEN]                          # (E, HEN)
    b1 = p_ref[R_B1:R_B1 + 1, 0:HEN]                             # (1, HEN)
    zcatf = p_ref[R_ZCAT:R_ZCAT + HEN, 0:ZW]                     # (HEN, 96)
    bcatf = p_ref[R_BCAT:R_BCAT + 1, 0:ZW]                       # (1, 96)
    bd2w = p_ref[R_BD2W:R_BD2W + ZW, 0:HID2W]                    # (96, 48)
    b2c = p_ref[R_B2C:R_B2C + 1, 0:HID2W]                        # (1, 48)
    u2t = p_ref[R_U2T:R_U2T + HDE, 0:E]                          # (32, 16)
    ku = p_ref[R_KU:R_KU + HID2W, 0:HDE * D]                     # (48, 128)
    ss = p_ref[R_SS:R_SS + HDE * D, 0:HDE]                       # (128, 32)

    # encoder hidden
    zh = jnp.tanh(jnp.dot(x, w1t, preferred_element_type=f32) + b1)          # (TB, HEN)

    # fused: encoder layer-2 folded into the decoder/drift/diffusion hidden layers
    t = jnp.tanh(jnp.dot(zh, zcatf, preferred_element_type=f32) + bcatf)     # (TB, 96)

    t_dec = t[:, :HDE]                                            # decoder tanh(h)
    gp = 1.0 - t_dec * t_dec                                      # tanh'
    gpp = -2.0 * t_dec * gp                                       # tanh''

    # fused second layers with U1^T pre-folded into the drift branch:
    #   hid2 = [aU1 | sflat], aU1[n] = a_n @ U1^T, sflat = latent diffusion (flat D*D)
    hid2 = jnp.dot(t, bd2w, preferred_element_type=f32) + b2c     # (TB, 48)
    aU1 = hid2[:, :HDE]                                           # (TB, HDE)

    # q contraction:
    #   A[n, m*D+l] = sum_j U1[m,j] * b[n,j,l]   (kron(U1, I_D), zero rows eat aU1)
    #   svec[n, m]  = sum_l A[n, m*D+l]^2        (block-sum matmul)
    A = jnp.dot(hid2, ku, preferred_element_type=f32)             # (TB, HDE*D)
    svec = jnp.dot(A * A, ss, preferred_element_type=f32)         # (TB, HDE)

    # fused output projection: tangent drift + 0.5*q share the U2^T RHS
    out_ref[...] = jnp.dot(gp * aU1 + 0.5 * gpp * svec, u2t,
                           preferred_element_type=f32)            # (TB, E)


def _pad_block(a):
    """Pad a 2-D f32 block to (ceil(rows/8)*8, LANES)."""
    r, c = a.shape
    out = jnp.zeros((_rup8(r), LANES), jnp.float32)
    return out.at[:r, :c].set(a.astype(jnp.float32))


def pack_params(p):
    """One-time parameter packing into a single sublane-stacked, 128-lane slab."""
    f32 = jnp.float32
    U1t = p["U1"].T                                                       # (D, HDE)

    # fused z-projection with encoder layer-2 folded in
    zcat = jnp.concatenate([U1t, p["Wd1"].T, p["Ws1"].T], axis=1)         # (D, 96)
    bcat = jnp.concatenate([p["c1"], p["bd1"], p["bs1"]])[None, :]        # (1, 96)
    zcatf = p["W2"].T @ zcat                                              # (HEN, 96)
    bcatf = p["b2"][None, :] @ zcat + bcat                                # (1, 96)

    # block-diagonal second layers, U1^T folded into the drift branch,
    # zero-padded with HDE leading rows so the whole `t` slab feeds the MXU.
    bd2w = jnp.zeros((ZW, HID2W), f32)
    bd2w = bd2w.at[HDE:HDE + HMU, :HDE].set(p["Wd2"].T @ U1t)             # drift->aU1
    bd2w = bd2w.at[HDE + HMU:, HDE:].set(p["Ws2"].T)                      # diffusion
    b2cat = jnp.concatenate([p["bd2"] @ U1t, p["bs2"]])[None, :]          # (1, 48)

    # kron(U1, I_D)^T, zero-padded with HDE leading rows (aU1 columns contribute 0)
    ku = jnp.kron(p["U1"], jnp.eye(D, dtype=f32)).T                       # (D*D, HDE*D)
    ku_pad = jnp.zeros((HID2W, HDE * D), f32).at[HDE:, :].set(ku)         # (48, 128)
    ss = jnp.kron(jnp.eye(HDE, dtype=f32), jnp.ones((1, D), f32)).T       # (128, 32)

    blocks = [
        p["W1"].T, p["b1"][None, :],        # encoder layer 1
        zcatf, bcatf,                       # fused z-projection
        bd2w, b2cat,                        # fused second layers
        p["U2"].T,                          # decoder output weight
        ku_pad, ss,                         # q-contraction matrices
    ]
    slab = jnp.concatenate([_pad_block(b) for b in blocks], axis=0)       # (P_ROWS, 128)
    assert slab.shape == (P_ROWS, LANES)
    return slab


@jax.jit
def autoencoder_drift_forward(x, pslab):
    """Pallas wrapper. x: (n, E) float32, pslab: pack_params(...) -> mu_model (n, E)."""
    n = x.shape[0]
    if n >= TB_MAX:
        tb = TB_MAX
    else:
        tb = max(8, _rup8(n))
    n_pad = -(-n // tb) * tb
    x_pad = jnp.pad(x, ((0, n_pad - n), (0, 0))) if n_pad != n else x

    out = pl.pallas_call(
        drift_kernel,
        out_shape=jax.ShapeDtypeStruct((n_pad, E), jnp.float32),
        grid=(n_pad // tb,),
        in_specs=[
            pl.BlockSpec((tb, E), lambda i: (i, 0)),
            pl.BlockSpec((P_ROWS, LANES), lambda i: (0, 0)),   # params resident
        ],
        out_specs=pl.BlockSpec((tb, E), lambda i: (i, 0)),
        compiler_params=pltpu.CompilerParams(
            dimension_semantics=("parallel",)),                # v7x: shard batch over 2 TCs
    )(x_pad, pslab)
    # TODO(synk): for very large n, present the output lane-dense ((n*E/128, 128) view)
    # to turn 16/128 masked stores into full-lane stores; irrelevant at this size.
    return out[:n]


# ---- deterministic parameter init (shapes from the module's __init__) ----
def init_params(key):
    ks = jax.random.split(key, 16)
    sc = 0.3
    w = lambda k, s: sc * jax.random.normal(k, s, jnp.float32)
    return dict(
        W1=w(ks[0], (HEN, E)),   b1=w(ks[1], (HEN,)),         # encoder
        W2=w(ks[2], (D, HEN)),   b2=w(ks[3], (D,)),
        U1=w(ks[4], (HDE, D)),   c1=w(ks[5], (HDE,)),         # decoder
        U2=w(ks[6], (E, HDE)),   c2=w(ks[7], (E,)),           # c2 legitimately unused by mu
        Wd1=w(ks[8], (HMU, D)),  bd1=w(ks[9], (HMU,)),        # drift net
        Wd2=w(ks[10], (D, HMU)), bd2=w(ks[11], (D,)),
        Ws1=w(ks[12], (HSG, D)), bs1=w(ks[13], (HSG,)),       # diffusion net
        Ws2=w(ks[14], (D * D, HSG)), bs2=w(ks[15], (D * D,)),
    )


# ---- pure-JAX reference mirroring the PyTorch forward (autograd Jac/Hess) ----
def reference_forward(x, p):
    encoder = lambda xx: jnp.tanh(xx @ p["W1"].T + p["b1"]) @ p["W2"].T + p["b2"]
    decoder = lambda zz: jnp.tanh(zz @ p["U1"].T + p["c1"]) @ p["U2"].T + p["c2"]
    drift_net = lambda zz: jnp.tanh(zz @ p["Wd1"].T + p["bd1"]) @ p["Wd2"].T + p["bd2"]
    diffusion_net = lambda zz: jnp.tanh(zz @ p["Ws1"].T + p["bs1"]) @ p["Ws2"].T + p["bs2"]

    z = encoder(x)                                        # (N, D)
    dphi = jax.vmap(jax.jacfwd(decoder))(z)               # (N, E, D)
    b = diffusion_net(z).reshape(x.shape[0], D, D)        # (N, D, D)
    sigma = jnp.einsum("nij,nkj->nik", b, b)              # bmm(b, b.mT)
    hess = jax.vmap(jax.hessian(decoder))(z)              # (N, E, D, D)
    q = jnp.einsum("njk,nrkj->nr", sigma, hess)
    a = drift_net(z)
    tangent = jnp.einsum("nrj,nj->nr", dphi, a)           # bmm(dphi, a[...,None]).squeeze()
    return tangent + 0.5 * q


if __name__ == "__main__":
    key = jax.random.PRNGKey(0)
    kx, kp = jax.random.split(key)
    x = jax.random.normal(kx, (N, E), jnp.float32)
    params = init_params(kp)
    pslab = pack_params(params)             # one-time packing (folds / kron / blockdiag)

    mu = autoencoder_drift_forward(x, pslab)
    mu = jax.block_until_ready(mu)

    mu_ref = reference_forward(x, params)
    assert mu.shape == (N, E)
    err = float(jnp.max(jnp.abs(mu - mu_ref)))
    assert jnp.allclose(mu, mu_ref, rtol=1e-4, atol=1e-4), f"max abs err = {err}"
    print("KERNEL_OK")
</pallas_src>

<mosaic_0001>
module attributes {stable_mosaic.version = 11 : i64} {
  func.func @drift_kernel(%arg0: i32, %arg1: memref<16x16xf32, #tpu.memory_space<vmem>>, %arg2: memref<376x128xf32, #tpu.memory_space<vmem>>, %arg3: memref<16x16xf32, #tpu.memory_space<vmem>>) attributes {dimension_semantics = [#tpu.dimension_semantics<parallel>], iteration_bounds = array<i64: 1>, scalar_prefetch = 0 : i64, scratch_operands = 0 : i64, tpu.core_type = #tpu.core_type<tc>, window_params = [{transform_indices = @transform_0, window_bounds = array<i64: 16, 16>}, {pipeline_mode = #tpu.pipeline_mode<synchronous>, transform_indices = @transform_1, window_bounds = array<i64: 376, 128>}, {transform_indices = @transform_2, window_bounds = array<i64: 16, 16>}]} {
    %c0 = arith.constant 0 : index
    %c0_0 = arith.constant 0 : index
    %0 = vector.load %arg1[%c0, %c0_0] : memref<16x16xf32, #tpu.memory_space<vmem>>, vector<16x16xf32>
    %c0_1 = arith.constant 0 : index
    %c0_2 = arith.constant 0 : index
    %1 = vector.load %arg2[%c0_1, %c0_2] : memref<376x128xf32, #tpu.memory_space<vmem>>, vector<16x32xf32>
    %c16 = arith.constant 16 : index
    %c0_3 = arith.constant 0 : index
    %2 = vector.load %arg2[%c16, %c0_3] : memref<376x128xf32, #tpu.memory_space<vmem>>, vector<1x32xf32>
    %c24 = arith.constant 24 : index
    %c0_4 = arith.constant 0 : index
    %3 = vector.load %arg2[%c24, %c0_4] : memref<376x128xf32, #tpu.memory_space<vmem>>, vector<32x96xf32>
    %c56 = arith.constant 56 : index
    %c0_5 = arith.constant 0 : index
    %4 = vector.load %arg2[%c56, %c0_5] : memref<376x128xf32, #tpu.memory_space<vmem>>, vector<1x96xf32>
    %c64 = arith.constant 64 : index
    %c0_6 = arith.constant 0 : index
    %5 = vector.load %arg2[%c64, %c0_6] : memref<376x128xf32, #tpu.memory_space<vmem>>, vector<96x48xf32>
    %c160 = arith.constant 160 : index
    %c0_7 = arith.constant 0 : index
    %6 = vector.load %arg2[%c160, %c0_7] : memref<376x128xf32, #tpu.memory_space<vmem>>, vector<1x48xf32>
    %c168 = arith.constant 168 : index
    %c0_8 = arith.constant 0 : index
    %7 = vector.load %arg2[%c168, %c0_8] : memref<376x128xf32, #tpu.memory_space<vmem>>, vector<32x16xf32>
    %c200 = arith.constant 200 : index
    %c0_9 = arith.constant 0 : index
    %8 = vector.load %arg2[%c200, %c0_9] : memref<376x128xf32, #tpu.memory_space<vmem>>, vector<48x128xf32>
    %c248 = arith.constant 248 : index
    %c0_10 = arith.constant 0 : index
    %9 = vector.load %arg2[%c248, %c0_10] : memref<376x128xf32, #tpu.memory_space<vmem>>, vector<128x32xf32>
    %cst = arith.constant dense<0.000000e+00> : vector<16x32xf32>
    %10 = tpu.matmul %0, %1, %cst {dimension_numbers = #tpu.dot_dimension_numbers<[1], [0], [0], [1], [0, 0, 1, 1], [], []>} : vector<16x16xf32>, vector<16x32xf32>, vector<16x32xf32> -> vector<16x32xf32>
    %11 = vector.broadcast %2 : vector<1x32xf32> to vector<16x32xf32>
    %12 = arith.addf %10, %11 : vector<16x32xf32>
    %13 = math.tanh %12 : vector<16x32xf32>
    %cst_11 = arith.constant dense<0.000000e+00> : vector<16x96xf32>
    %14 = tpu.matmul %13, %3, %cst_11 {dimension_numbers = #tpu.dot_dimension_numbers<[1], [0], [0], [1], [0, 0, 1, 1], [], []>} : vector<16x32xf32>, vector<32x96xf32>, vector<16x96xf32> -> vector<16x96xf32>
    %15 = vector.broadcast %4 : vector<1x96xf32> to vector<16x96xf32>
    %16 = arith.addf %14, %15 : vector<16x96xf32>
    %17 = math.tanh %16 : vector<16x96xf32>
    %18 = vector.extract_strided_slice %17 {offsets = [0, 0], sizes = [16, 32], strides = [1, 1]} : vector<16x96xf32> to vector<16x32xf32>
    %19 = arith.mulf %18, %18 : vector<16x32xf32>
    %cst_12 = arith.constant 1.000000e+00 : f32
    %20 = vector.broadcast %cst_12 : f32 to vector<16x32xf32>
    %21 = arith.subf %20, %19 : vector<16x32xf32>
    %cst_13 = arith.constant -2.000000e+00 : f32
    %22 = vector.broadcast %cst_13 : f32 to vector<16x32xf32>
    %23 = arith.mulf %22, %18 : vector<16x32xf32>
    %24 = arith.mulf %23, %21 : vector<16x32xf32>
    %cst_14 = arith.constant dense<0.000000e+00> : vector<16x48xf32>
    %25 = tpu.matmul %17, %5, %cst_14 {dimension_numbers = #tpu.dot_dimension_numbers<[1], [0], [0], [1], [0, 0, 1, 1], [], []>} : vector<16x96xf32>, vector<96x48xf32>, vector<16x48xf32> -> vector<16x48xf32>
    %26 = vector.broadcast %6 : vector<1x48xf32> to vector<16x48xf32>
    %27 = arith.addf %25, %26 : vector<16x48xf32>
    %28 = vector.extract_strided_slice %27 {offsets = [0, 0], sizes = [16, 32], strides = [1, 1]} : vector<16x48xf32> to vector<16x32xf32>
    %cst_15 = arith.constant dense<0.000000e+00> : vector<16x128xf32>
    %29 = tpu.matmul %27, %8, %cst_15 {dimension_numbers = #tpu.dot_dimension_numbers<[1], [0], [0], [1], [0, 0, 1, 1], [], []>} : vector<16x48xf32>, vector<48x128xf32>, vector<16x128xf32> -> vector<16x128xf32>
    %30 = arith.mulf %29, %29 : vector<16x128xf32>
    %cst_16 = arith.constant dense<0.000000e+00> : vector<16x32xf32>
    %31 = tpu.matmul %30, %9, %cst_16 {dimension_numbers = #tpu.dot_dimension_numbers<[1], [0], [0], [1], [0, 0, 1, 1], [], []>} : vector<16x128xf32>, vector<128x32xf32>, vector<16x32xf32> -> vector<16x32xf32>
    %32 = arith.mulf %21, %28 : vector<16x32xf32>
    %cst_17 = arith.constant 5.000000e-01 : f32
    %33 = vector.broadcast %cst_17 : f32 to vector<16x32xf32>
    %34 = arith.mulf %33, %24 : vector<16x32xf32>
    %35 = arith.mulf %34, %31 : vector<16x32xf32>
    %36 = arith.addf %32, %35 : vector<16x32xf32>
    %cst_18 = arith.constant dense<0.000000e+00> : vector<16x16xf32>
    %37 = tpu.matmul %36, %7, %cst_18 {dimension_numbers = #tpu.dot_dimension_numbers<[1], [0], [0], [1], [0, 0, 1, 1], [], []>} : vector<16x32xf32>, vector<32x16xf32>, vector<16x16xf32> -> vector<16x16xf32>
    %c0_19 = arith.constant 0 : index
    %c0_20 = arith.constant 0 : index
    %38 = vector.load %arg3[%c0_19, %c0_20] : memref<16x16xf32, #tpu.memory_space<vmem>>, vector<16x16xf32>
    tpu.vector_store %arg3[%c0_19, %c0_20], %37 {strides = array<i32>} : memref<16x16xf32, #tpu.memory_space<vmem>>, vector<16x16xf32>,
    return
  }
  func.func @transform_0(%arg0: i32) -> (i32, i32) {
    %c0_i32 = arith.constant 0 : i32
    %c0_i32_0 = arith.constant 0 : i32
    return %arg0, %c0_i32 : i32, i32
  }
  func.func @transform_1(%arg0: i32) -> (i32, i32) {
    %c0_i32 = arith.constant 0 : i32
    %c0_i32_0 = arith.constant 0 : i32
    %c0_i32_1 = arith.constant 0 : i32
    return %c0_i32, %c0_i32_0 : i32, i32
  }
  func.func @transform_2(%arg0: i32) -> (i32, i32) {
    %c0_i32 = arith.constant 0 : i32
    %c0_i32_0 = arith.constant 0 : i32
    return %arg0, %c0_i32 : i32, i32
  }
}

</mosaic_0001>

<llo_original>
// kernel: autoencoder_drift_forward.1
$region0: #{autoencoder_drift_forward.1}
  #allocation0 [shape = 'u32[]', space=smem, size = 0x4, offset = 0x4, fixed_abs, tag = 'smem constant byte address 0x4 - core index']
  #allocation1 [shape = 'u32[144,128]{1,0:T(1,128)}', space=vmem, size = 0x12000, scoped, tag = 'internal scratch']
  %s0 = inlined_call_operand.hbm [shape: f32[16,16], index: 0, kind: input, shape index: {}]
  %s1 = inlined_call_operand.hbm [shape: f32[376,128], index: 1, kind: input, shape index: {}]
  %s2 = inlined_call_operand.hbm [shape: f32[16,16], index: 2, kind: output, shape index: {}]
  %s3 = sld [smem:[#allocation0]]
  $region26: #{autoencoder_drift_forward.1} parent=0
    _
  %s5 = ssub.s32 1, %s3
  %s6 = scalar_select 0, %s5, %s3
  $region1: #{autoencoder_drift_forward.1} parent=0
    #allocation2 [shape = 'u8[8192]{0}', space=vmem, size = 0x2000, scoped, tag = 'input window, operand 0, single buffered']
    #allocation3 [shape = 's32[1]{0}', space=sflag, size = 0x4, scoped, tag = 'scoped memory for autoencoder_drift_forward.1']
    #allocation4 [shape = 's32[1]{0}', space=sflag, size = 0x4, scoped, tag = 'scoped memory for autoencoder_drift_forward.1']
    #allocation5 [shape = 'u8[192512]{0}', space=vmem, size = 0x2f000, scoped, tag = 'input window, operand 1, single buffered']
    #allocation6 [shape = 's32[1]{0}', space=sflag, size = 0x4, scoped, tag = 'scoped memory for autoencoder_drift_forward.1']
    #allocation7 [shape = 'u8[8192]{0}', space=vmem, size = 0x2000, scoped, tag = 'output window, operand 0, single buffered']
    %7 = vsyncpa [#allocation3], 0
    %8 = vsyncpa [#allocation6], 0
    %9 = vsyncpa [#allocation4], 0
    // Predicated region
    $region2: #{autoencoder_drift_forward.1} parent=1 // pred_check
      _
    $region3: #{autoencoder_drift_forward.1} parent=1 // pred_check_branch
      %11 = sbr.rel (0) target = $region5
    $region4: #{autoencoder_drift_forward.1} parent=1 // pred_region
      %s13 = ssub.s32 256, 256
      %14 = vsyncadd [#allocation3], %s13
      %s15 = sshll.u32 [#allocation2], 4
      %s16 = int_to_ptr.vmem [resolvable:$true] %s15
      %21 = dma.hbm_to_vmem [thread:$0]  %s0, 256, %s16, [#allocation3], 128, 128, 8
    $region5: #{autoencoder_drift_forward.1} parent=1 // pred_fallthru
      _
    // Predicated region
    $region6: #{autoencoder_drift_forward.1} parent=1 // pred_check
      _
    $region7: #{autoencoder_drift_forward.1} parent=1 // pred_check_branch
      %23 = sbr.rel (0) target = $region9
    $region8: #{autoencoder_drift_forward.1} parent=1 // pred_region
      %s25 = ssub.s32 6016, 6016
      %26 = vsyncadd [#allocation6], %s25
      %s27 = sshll.u32 [#allocation5], 4
      %s28 = int_to_ptr.vmem [resolvable:$true] %s27
      %33 = dma.hbm_to_vmem [thread:$0]  %s1, 6016, %s28, [#allocation6], 128, 128, 8
    $region9: #{autoencoder_drift_forward.1} parent=1 // pred_fallthru
      _
    // Predicated region
    $region10: #{autoencoder_drift_forward.1} parent=1 // pred_check
      _
    $region11: #{autoencoder_drift_forward.1} parent=1 // pred_check_branch
      %35 = sbr.rel (0) target = $region13
    $region12: #{autoencoder_drift_forward.1} parent=1 // pred_region
      %36 = dma.done [#allocation3], 256
    $region13: #{autoencoder_drift_forward.1} parent=1 // pred_fallthru
      _
    // Predicated region
    $region14: #{autoencoder_drift_forward.1} parent=1 // pred_check
      _
    $region15: #{autoencoder_drift_forward.1} parent=1 // pred_check_branch
      %38 = sbr.rel (0) target = $region17
    $region16: #{autoencoder_drift_forward.1} parent=1 // pred_region
      %39 = dma.done [#allocation6], 6016
    $region17: #{autoencoder_drift_forward.1} parent=1 // pred_fallthru
      _
    %v40 = vld [vmem:[#allocation2] sm:$0xff]
    %v41 = vld [vmem:[#allocation2 + $0x8] sm:$0xff]
    %v42 = vld [vmem:[#allocation5] sm:$0xff]
    %v43 = vld [vmem:[#allocation5 + $0x8] sm:$0xff]
    %v44 = vld [vmem:[#allocation5 + $0x10] sm:$0x1]
    %v45 = vld [vmem:[#allocation5 + $0x18] sm:$0xff]
    %v46 = vld [vmem:[#allocation5 + $0x20] sm:$0xff]
    %v47 = vld [vmem:[#allocation5 + $0x28] sm:$0xff]
    %v48 = vld [vmem:[#allocation5 + $0x30] sm:$0xff]
    %v49 = vld [vmem:[#allocation5 + $0x38] sm:$0x1]
    %v50 = vld [vmem:[#allocation5 + $0x40] sm:$0xff]
    %v51 = vld [vmem:[#allocation5 + $0x48] sm:$0xff]
    %v52 = vld [vmem:[#allocation5 + $0x50] sm:$0xff]
    %v53 = vld [vmem:[#allocation5 + $0x58] sm:$0xff]
    %v54 = vld [vmem:[#allocation5 + $0x60] sm:$0xff]
    %v55 = vld [vmem:[#allocation5 + $0x68] sm:$0xff]
    %v56 = vld [vmem:[#allocation5 + $0x70] sm:$0xff]
    %v57 = vld [vmem:[#allocation5 + $0x78] sm:$0xff]
    %v58 = vld [vmem:[#allocation5 + $0x80] sm:$0xff]
    %v59 = vld [vmem:[#allocation5 + $0x88] sm:$0xff]
    %v60 = vld [vmem:[#allocation5 + $0x90] sm:$0xff]
    %v61 = vld [vmem:[#allocation5 + $0x98] sm:$0xff]
    %v62 = vld [vmem:[#allocation5 + $0xa0] sm:$0x1]
    %v63 = vld [vmem:[#allocation5 + $0xa8] sm:$0xff]
    %v64 = vld [vmem:[#allocation5 + $0xb0] sm:$0xff]
    %v65 = vld [vmem:[#allocation5 + $0xb8] sm:$0xff]
    %v66 = vld [vmem:[#allocation5 + $0xc0] sm:$0xff]
    %v67 = vld [vmem:[#allocation5 + $0xc8] sm:$0xff]
    %v68 = vld [vmem:[#allocation5 + $0xd0] sm:$0xff]
    %v69 = vld [vmem:[#allocation5 + $0xd8] sm:$0xff]
    %v70 = vld [vmem:[#allocation5 + $0xe0] sm:$0xff]
    %v71 = vld [vmem:[#allocation5 + $0xe8] sm:$0xff]
    %v72 = vld [vmem:[#allocation5 + $0xf0] sm:$0xff]
    %v73 = vld [vmem:[#allocation5 + $0xf8] sm:$0xff]
    %v74 = vld [vmem:[#allocation5 + $0x100] sm:$0xff]
    %v75 = vld [vmem:[#allocation5 + $0x108] sm:$0xff]
    %v76 = vld [vmem:[#allocation5 + $0x110] sm:$0xff]
    %v77 = vld [vmem:[#allocation5 + $0x118] sm:$0xff]
    %v78 = vld [vmem:[#allocation5 + $0x120] sm:$0xff]
    %v79 = vld [vmem:[#allocation5 + $0x128] sm:$0xff]
    %v80 = vld [vmem:[#allocation5 + $0x130] sm:$0xff]
    %v81 = vld [vmem:[#allocation5 + $0x138] sm:$0xff]
    %v82 = vld [vmem:[#allocation5 + $0x140] sm:$0xff]
    %v83 = vld [vmem:[#allocation5 + $0x148] sm:$0xff]
    %v84 = vld [vmem:[#allocation5 + $0x150] sm:$0xff]
    %v85 = vld [vmem:[#allocation5 + $0x158] sm:$0xff]
    %v86 = vld [vmem:[#allocation5 + $0x160] sm:$0xff]
    %v87 = vld [vmem:[#allocation5 + $0x168] sm:$0xff]
    %v88 = vld [vmem:[#allocation5 + $0x170] sm:$0xff]
    %v89 = vlaneseq
    %v90 = vshrl.u32 %v89, 7
    %v91 = vsub.s32 0, %v90
    %v92 = vrot.slane %v44, %v91
    %vm93 = vcmask 130048
    %v95 = vsel %vm93, %v40, 0
    %v98 = vsel %vm93, %v41, 0
    %100 = vmatprep.subr.mxu0 0.0
    %101 = vmatpush1.msra.mxu0 %v42
    %102 = vmatprep.subr.mxu0 0.0
    %103 = vmatpush1.msra.mxu0 %v43
    %104 = vmatprep.subr.mxu0 0.0
    %105 = vmatpush1.msra.mxu0 0.0
    %106 = vmatprep.subr.mxu0 0.0
    %107 = vmatpush1.msra.mxu0 0.0
    %108 = vmatprep.subr.mxu0 0.0
    %109 = vmatpush1.msra.mxu0 0.0
    %110 = vmatprep.subr.mxu0 0.0
    %111 = vmatpush1.msra.mxu0 0.0
    %112 = vmatprep.subr.mxu0 0.0
    %113 = vmatpush1.msra.mxu0 0.0
    %114 = vmatprep.subr.mxu0 0.0
    %115 = vmatpush1.msra.mxu0 0.0
    %116 = vmatprep.subr.mxu0 0.0
    %117 = vmatpush1.msra.mxu0 0.0
    %118 = vmatprep.subr.mxu0 0.0
    %119 = vmatpush1.msra.mxu0 0.0
    %120 = vmatprep.subr.mxu0 0.0
    %121 = vmatpush1.msra.mxu0 0.0
    %122 = vmatprep.subr.mxu0 0.0
    %123 = vmatpush1.msra.mxu0 0.0
    %124 = vmatprep.subr.mxu0 0.0
    %125 = vmatpush1.msra.mxu0 0.0
    %126 = vmatprep.subr.mxu0 0.0
    %127 = vmatpush1.msra.mxu0 0.0
    %128 = vmatprep.subr.mxu0 0.0
    %129 = vmatpush1.msra.mxu0 0.0
    %130 = vmatprep.subr.mxu0 0.0
    %131 = vmatpush1.msra.mxu0 0.0
    %132 = vmatprep.subr.mxu0 0.0
    %133 = vmatpush1.msra.mxu0 0.0
    %134 = vmatprep.subr.mxu0 0.0
    %135 = vmatpush1.msra.mxu0 0.0
    %136 = vmatprep.subr.mxu0 0.0
    %137 = vmatpush1.msra.mxu0 0.0
    %138 = vmatprep.subr.mxu0 0.0
    %139 = vmatpush1.msra.mxu0 0.0
    %140 = vmatprep.subr.mxu0 0.0
    %141 = vmatpush1.msra.mxu0 0.0
    %142 = vmatprep.subr.mxu0 0.0
    %143 = vmatpush1.msra.mxu0 0.0
    %144 = vmatprep.subr.mxu0 0.0
    %145 = vmatpush1.msra.mxu0 0.0
    %146 = vmatprep.subr.mxu0 0.0
    %147 = vmatpush1.msra.mxu0 0.0
    %148 = vmatprep.subr.mxu0 0.0
    %149 = vmatpush1.msra.mxu0 0.0
    %150 = vmatprep.subr.mxu0 0.0
    %151 = vmatpush1.msra.mxu0 0.0
    %152 = vmatprep.subr.mxu0 0.0
    %153 = vmatpush1.msra.mxu0 0.0
    %154 = vmatprep.subr.mxu0 0.0
    %155 = vmatpush1.msra.mxu0 0.0
    %156 = vmatprep.subr.mxu0 0.0
    %157 = vmatpush1.msra.mxu0 0.0
    %158 = vmatprep.subr.mxu0 0.0
    %159 = vmatpush1.msra.mxu0 0.0
    %160 = vmatprep.subr.mxu0 0.0
    %161 = vmatpush1.msra.mxu0 0.0
    %162 = vmatprep.subr.mxu0 0.0
    %163 = vmatpush1.msra.mxu0 0.0
    %164 = vmatprep.mubr.f32.mxu0 0.0
    %165 = vmatmul.mubr.f32.gmra.mrb[0].mxu0 %v95
    %v166 = vpop.f32.mrb[0].mxu0
    %v167 = vadd.f32 %v92, %v166
    %v168 = vpop.f32.mrb[0].mxu0
    %169 = vmatprep.mubr.f32.mxu0 0.0
    %170 = vmatmul.mubr.f32.gmra.mrb[0].mxu0 %v98
    %v171 = vpop.f32.mrb[0].mxu0
    %v172 = vadd.f32 %v92, %v171
    %v173 = vpop.f32.mrb[0].mxu0
    %174 = vdwg.mxu0
    %v175 = vtanh.pop %v167
    %v176 = vtanh.pop %v172
    %v177 = vlaneseq
    %v178 = vshrl.u32 %v177, 7
    %v179 = vsub.s32 0, %v178
    %v180 = vrot.slane %v49, %v179
    %vm181 = vcmask 261120
    %v183 = vsel %vm181, %v175, 0
    %v186 = vsel %vm181, %v176, 0
    %188 = vmatprep.subr.mxu0 0.0
    %189 = vmatpush1.msra.mxu0 %v45
    %190 = vmatprep.subr.mxu0 0.0
    %191 = vmatpush1.msra.mxu0 %v46
    %192 = vmatprep.subr.mxu0 0.0
    %193 = vmatpush1.msra.mxu0 %v47
    %194 = vmatprep.subr.mxu0 0.0
    %195 = vmatpush1.msra.mxu0 %v48
    %196 = vmatprep.subr.mxu0 0.0
    %197 = vmatpush1.msra.mxu0 0.0
    %198 = vmatprep.subr.mxu0 0.0
    %199 = vmatpush1.msra.mxu0 0.0
    %200 = vmatprep.subr.mxu0 0.0
    %201 = vmatpush1.msra.mxu0 0.0
    %202 = vmatprep.subr.mxu0 0.0
    %203 = vmatpush1.msra.mxu0 0.0
    %204 = vmatprep.subr.mxu0 0.0
    %205 = vmatpush1.msra.mxu0 0.0
    %206 = vmatprep.subr.mxu0 0.0
    %207 = vmatpush1.msra.mxu0 0.0
    %208 = vmatprep.subr.mxu0 0.0
    %209 = vmatpush1.msra.mxu0 0.0
    %210 = vmatprep.subr.mxu0 0.0
    %211 = vmatpush1.msra.mxu0 0.0
    %212 = vmatprep.subr.mxu0 0.0
    %213 = vmatpush1.msra.mxu0 0.0
    %214 = vmatprep.subr.mxu0 0.0
    %215 = vmatpush1.msra.mxu0 0.0
    %216 = vmatprep.subr.mxu0 0.0
    %217 = vmatpush1.msra.mxu0 0.0
    %218 = vmatprep.subr.mxu0 0.0
    %219 = vmatpush1.msra.mxu0 0.0
    %220 = vmatprep.subr.mxu0 0.0
    %221 = vmatpush1.msra.mxu0 0.0
    %222 = vmatprep.subr.mxu0 0.0
    %223 = vmatpush1.msra.mxu0 0.0
    %224 = vmatprep.subr.mxu0 0.0
    %225 = vmatpush1.msra.mxu0 0.0
    %226 = vmatprep.subr.mxu0 0.0
    %227 = vmatpush1.msra.mxu0 0.0
    %228 = vmatprep.subr.mxu0 0.0
    %229 = vmatpush1.msra.mxu0 0.0
    %230 = vmatprep.subr.mxu0 0.0
    %231 = vmatpush1.msra.mxu0 0.0
    %232 = vmatprep.subr.mxu0 0.0
    %233 = vmatpush1.msra.mxu0 0.0
    %234 = vmatprep.subr.mxu0 0.0
    %235 = vmatpush1.msra.mxu0 0.0
    %236 = vmatprep.subr.mxu0 0.0
    %237 = vmatpush1.msra.mxu0 0.0
    %238 = vmatprep.subr.mxu0 0.0
    %239 = vmatpush1.msra.mxu0 0.0
    %240 = vmatprep.subr.mxu0 0.0
    %241 = vmatpush1.msra.mxu0 0.0
    %242 = vmatprep.subr.mxu0 0.0
    %243 = vmatpush1.msra.mxu0 0.0
    %244 = vmatprep.subr.mxu0 0.0
    %245 = vmatpush1.msra.mxu0 0.0
    %246 = vmatprep.subr.mxu0 0.0
    %247 = vmatpush1.msra.mxu0 0.0
    %248 = vmatprep.subr.mxu0 0.0
    %249 = vmatpush1.msra.mxu0 0.0
    %250 = vmatprep.subr.mxu0 0.0
    %251 = vmatpush1.msra.mxu0 0.0
    %252 = vmatprep.mubr.f32.mxu0 0.0
    %253 = vmatmul.mubr.f32.gmra.mrb[0].mxu0 %v183
    %v254 = vpop.f32.mrb[0].mxu0
    %v255 = vadd.f32 %v180, %v254
    %v256 = vpop.f32.mrb[0].mxu0
    %257 = vmatprep.mubr.f32.mxu0 0.0
    %258 = vmatmul.mubr.f32.gmra.mrb[0].mxu0 %v186
    %v259 = vpop.f32.mrb[0].mxu0
    %v260 = vadd.f32 %v180, %v259
    %v261 = vpop.f32.mrb[0].mxu0
    %262 = vdwg.mxu0
    %v263 = vtanh.pop %v255
    %v264 = vtanh.pop %v260
    %v265 = vmul.f32 %v263, %v263
    %v266 = vmul.f32 %v264, %v264
    %v267 = vsub.f32 1.0, %v265
    %v268 = vsub.f32 1.0, %v266
    %v269 = vmul.f32 %v263, -2.0
    %v270 = vmul.f32 %v264, -2.0
    %v271 = vmul.f32 %v269, %v267
    %v272 = vmul.f32 %v270, %v268
    %v273 = vlaneseq
    %v274 = vshrl.u32 %v273, 7
    %v275 = vsub.s32 0, %v274
    %v276 = vrot.slane %v62, %v275
    %vm277 = vcmask 785408
    %v279 = vsel %vm277, %v263, 0
    %v282 = vsel %vm277, %v264, 0
    %284 = vmatprep.subr.mxu0 0.0
    %285 = vmatpush1.msra.mxu0 %v50
    %286 = vmatprep.subr.mxu0 0.0
    %287 = vmatpush1.msra.mxu0 %v51
    %288 = vmatprep.subr.mxu0 0.0
    %289 = vmatpush1.msra.mxu0 %v52
    %290 = vmatprep.subr.mxu0 0.0
    %291 = vmatpush1.msra.mxu0 %v53
    %292 = vmatprep.subr.mxu0 0.0
    %293 = vmatpush1.msra.mxu0 %v54
    %294 = vmatprep.subr.mxu0 0.0
    %295 = vmatpush1.msra.mxu0 %v55
    %296 = vmatprep.subr.mxu0 0.0
    %297 = vmatpush1.msra.mxu0 %v56
    %298 = vmatprep.subr.mxu0 0.0
    %299 = vmatpush1.msra.mxu0 %v57
    %300 = vmatprep.subr.mxu0 0.0
    %301 = vmatpush1.msra.mxu0 %v58
    %302 = vmatprep.subr.mxu0 0.0
    %303 = vmatpush1.msra.mxu0 %v59
    %304 = vmatprep.subr.mxu0 0.0
    %305 = vmatpush1.msra.mxu0 %v60
    %306 = vmatprep.subr.mxu0 0.0
    %307 = vmatpush1.msra.mxu0 %v61
    %308 = vmatprep.subr.mxu0 0.0
    %309 = vmatpush1.msra.mxu0 0.0
    %310 = vmatprep.subr.mxu0 0.0
    %311 = vmatpush1.msra.mxu0 0.0
    %312 = vmatprep.subr.mxu0 0.0
    %313 = vmatpush1.msra.mxu0 0.0
    %314 = vmatprep.subr.mxu0 0.0
    %315 = vmatpush1.msra.mxu0 0.0
    %316 = vmatprep.subr.mxu0 0.0
    %317 = vmatpush1.msra.mxu0 0.0
    %318 = vmatprep.subr.mxu0 0.0
    %319 = vmatpush1.msra.mxu0 0.0
    %320 = vmatprep.subr.mxu0 0.0
    %321 = vmatpush1.msra.mxu0 0.0
    %322 = vmatprep.subr.mxu0 0.0
    %323 = vmatpush1.msra.mxu0 0.0
    %324 = vmatprep.subr.mxu0 0.0
    %325 = vmatpush1.msra.mxu0 0.0
    %326 = vmatprep.subr.mxu0 0.0
    %327 = vmatpush1.msra.mxu0 0.0
    %328 = vmatprep.subr.mxu0 0.0
    %329 = vmatpush1.msra.mxu0 0.0
    %330 = vmatprep.subr.mxu0 0.0
    %331 = vmatpush1.msra.mxu0 0.0
    %332 = vmatprep.subr.mxu0 0.0
    %333 = vmatpush1.msra.mxu0 0.0
    %334 = vmatprep.subr.mxu0 0.0
    %335 = vmatpush1.msra.mxu0 0.0
    %336 = vmatprep.subr.mxu0 0.0
    %337 = vmatpush1.msra.mxu0 0.0
    %338 = vmatprep.subr.mxu0 0.0
    %339 = vmatpush1.msra.mxu0 0.0
    %340 = vmatprep.subr.mxu0 0.0
    %341 = vmatpush1.msra.mxu0 0.0
    %342 = vmatprep.subr.mxu0 0.0
    %343 = vmatpush1.msra.mxu0 0.0
    %344 = vmatprep.subr.mxu0 0.0
    %345 = vmatpush1.msra.mxu0 0.0
    %346 = vmatprep.subr.mxu0 0.0
    %347 = vmatpush1.msra.mxu0 0.0
    %348 = vmatprep.mubr.f32.mxu0 0.0
    %349 = vmatmul.mubr.f32.gmra.mrb[0].mxu0 %v279
    %v350 = vpop.f32.mrb[0].mxu0
    %v351 = vadd.f32 %v276, %v350
    %v352 = vpop.f32.mrb[0].mxu0
    %353 = vmatprep.mubr.f32.mxu0 0.0
    %354 = vmatmul.mubr.f32.gmra.mrb[0].mxu0 %v282
    %v355 = vpop.f32.mrb[0].mxu0
    %v356 = vadd.f32 %v276, %v355
    %v357 = vpop.f32.mrb[0].mxu0
    %358 = vdwg.mxu0
    %vm359 = vcmask 392192
    %v361 = vsel %vm359, %v351, 0
    %v364 = vsel %vm359, %v356, 0
    %366 = vmatprep.subr.mxu0 0.0
    %367 = vmatpush1.msra.mxu0 %v67
    %368 = vmatprep.subr.mxu0 0.0
    %369 = vmatpush1.msra.mxu0 %v68
    %370 = vmatprep.subr.mxu0 0.0
    %371 = vmatpush1.msra.mxu0 %v69
    %372 = vmatprep.subr.mxu0 0.0
    %373 = vmatpush1.msra.mxu0 %v70
    %374 = vmatprep.subr.mxu0 0.0
    %375 = vmatpush1.msra.mxu0 %v71
    %376 = vmatprep.subr.mxu0 0.0
    %377 = vmatpush1.msra.mxu0 %v72
    %378 = vmatprep.subr.mxu0 0.0
    %379 = vmatpush1.msra.mxu0 0.0
    %380 = vmatprep.subr.mxu0 0.0
    %381 = vmatpush1.msra.mxu0 0.0
    %382 = vmatprep.subr.mxu0 0.0
    %383 = vmatpush1.msra.mxu0 0.0
    %384 = vmatprep.subr.mxu0 0.0
    %385 = vmatpush1.msra.mxu0 0.0
    %386 = vmatprep.subr.mxu0 0.0
    %387 = vmatpush1.msra.mxu0 0.0
    %388 = vmatprep.subr.mxu0 0.0
    %389 = vmatpush1.msra.mxu0 0.0
    %390 = vmatprep.subr.mxu0 0.0
    %391 = vmatpush1.msra.mxu0 0.0
    %392 = vmatprep.subr.mxu0 0.0
    %393 = vmatpush1.msra.mxu0 0.0
    %394 = vmatprep.subr.mxu0 0.0
    %395 = vmatpush1.msra.mxu0 0.0
    %396 = vmatprep.subr.mxu0 0.0
    %397 = vmatpush1.msra.mxu0 0.0
    %398 = vmatprep.subr.mxu0 0.0
    %399 = vmatpush1.msra.mxu0 0.0
    %400 = vmatprep.subr.mxu0 0.0
    %401 = vmatpush1.msra.mxu0 0.0
    %402 = vmatprep.subr.mxu0 0.0
    %403 = vmatpush1.msra.mxu0 0.0
    %404 = vmatprep.subr.mxu0 0.0
    %405 = vmatpush1.msra.mxu0 0.0
    %406 = vmatprep.subr.mxu0 0.0
    %407 = vmatpush1.msra.mxu0 0.0
    %408 = vmatprep.subr.mxu0 0.0
    %409 = vmatpush1.msra.mxu0 0.0
    %410 = vmatprep.subr.mxu0 0.0
    %411 = vmatpush1.msra.mxu0 0.0
    %412 = vmatprep.subr.mxu0 0.0
    %413 = vmatpush1.msra.mxu0 0.0
    %414 = vmatprep.subr.mxu0 0.0
    %415 = vmatpush1.msra.mxu0 0.0
    %416 = vmatprep.subr.mxu0 0.0
    %417 = vmatpush1.msra.mxu0 0.0
    %418 = vmatprep.subr.mxu0 0.0
    %419 = vmatpush1.msra.mxu0 0.0
    %420 = vmatprep.subr.mxu0 0.0
    %421 = vmatpush1.msra.mxu0 0.0
    %422 = vmatprep.subr.mxu0 0.0
    %423 = vmatpush1.msra.mxu0 0.0
    %424 = vmatprep.subr.mxu0 0.0
    %425 = vmatpush1.msra.mxu0 0.0
    %426 = vmatprep.subr.mxu0 0.0
    %427 = vmatpush1.msra.mxu0 0.0
    %428 = vmatprep.subr.mxu0 0.0
    %429 = vmatpush1.msra.mxu0 0.0
    %430 = vmatprep.mubr.f32.mxu0 0.0
    %431 = vmatmul.mubr.f32.gmra.mrb[0].mxu0 %v361
    %v432 = vpop.f32.mrb[0].mxu0
    %v433 = vadd.f32 0.0, %v432
    %v434 = vpop.f32.mrb[0].mxu0
    %435 = vmatprep.mubr.f32.mxu0 0.0
    %436 = vmatmul.mubr.f32.gmra.mrb[0].mxu0 %v364
    %v437 = vpop.f32.mrb[0].mxu0
    %v438 = vadd.f32 0.0, %v437
    %v439 = vpop.f32.mrb[0].mxu0
    %440 = vdwg.mxu0
    %v441 = vmul.f32 %v433, %v433
    %v442 = vmul.f32 %v438, %v438
    %443 = vmatprep.subr.mxu0 0.0
    %444 = vmatpush1.msra.mxu0 %v73
    %445 = vmatprep.subr.mxu0 0.0
    %446 = vmatpush1.msra.mxu0 %v74
    %447 = vmatprep.subr.mxu0 0.0
    %448 = vmatpush1.msra.mxu0 %v75
    %449 = vmatprep.subr.mxu0 0.0
    %450 = vmatpush1.msra.mxu0 %v76
    %451 = vmatprep.subr.mxu0 0.0
    %452 = vmatpush1.msra.mxu0 %v77
    %453 = vmatprep.subr.mxu0 0.0
    %454 = vmatpush1.msra.mxu0 %v78
    %455 = vmatprep.subr.mxu0 0.0
    %456 = vmatpush1.msra.mxu0 %v79
    %457 = vmatprep.subr.mxu0 0.0
    %458 = vmatpush1.msra.mxu0 %v80
    %459 = vmatprep.subr.mxu0 0.0
    %460 = vmatpush1.msra.mxu0 %v81
    %461 = vmatprep.subr.mxu0 0.0
    %462 = vmatpush1.msra.mxu0 %v82
    %463 = vmatprep.subr.mxu0 0.0
    %464 = vmatpush1.msra.mxu0 %v83
    %465 = vmatprep.subr.mxu0 0.0
    %466 = vmatpush1.msra.mxu0 %v84
    %467 = vmatprep.subr.mxu0 0.0
    %468 = vmatpush1.msra.mxu0 %v85
    %469 = vmatprep.subr.mxu0 0.0
    %470 = vmatpush1.msra.mxu0 %v86
    %471 = vmatprep.subr.mxu0 0.0
    %472 = vmatpush1.msra.mxu0 %v87
    %473 = vmatprep.subr.mxu0 0.0
    %474 = vmatpush1.msra.mxu0 %v88
    %475 = vmatprep.subr.mxu0 0.0
    %476 = vmatpush1.msra.mxu0 0.0
    %477 = vmatprep.subr.mxu0 0.0
    %478 = vmatpush1.msra.mxu0 0.0
    %479 = vmatprep.subr.mxu0 0.0
    %480 = vmatpush1.msra.mxu0 0.0
    %481 = vmatprep.subr.mxu0 0.0
    %482 = vmatpush1.msra.mxu0 0.0
    %483 = vmatprep.subr.mxu0 0.0
    %484 = vmatpush1.msra.mxu0 0.0
    %485 = vmatprep.subr.mxu0 0.0
    %486 = vmatpush1.msra.mxu0 0.0
    %487 = vmatprep.subr.mxu0 0.0
    %488 = vmatpush1.msra.mxu0 0.0
    %489 = vmatprep.subr.mxu0 0.0
    %490 = vmatpush1.msra.mxu0 0.0
    %491 = vmatprep.subr.mxu0 0.0
    %492 = vmatpush1.msra.mxu0 0.0
    %493 = vmatprep.subr.mxu0 0.0
    %494 = vmatpush1.msra.mxu0 0.0
    %495 = vmatprep.subr.mxu0 0.0
    %496 = vmatpush1.msra.mxu0 0.0
    %497 = vmatprep.subr.mxu0 0.0
    %498 = vmatpush1.msra.mxu0 0.0
    %499 = vmatprep.subr.mxu0 0.0
    %500 = vmatpush1.msra.mxu0 0.0
    %501 = vmatprep.subr.mxu0 0.0
    %502 = vmatpush1.msra.mxu0 0.0
    %503 = vmatprep.subr.mxu0 0.0
    %504 = vmatpush1.msra.mxu0 0.0
    %505 = vmatprep.subr.mxu0 0.0
    %506 = vmatpush1.msra.mxu0 0.0
    %507 = vmatprep.mubr.f32.mxu0 0.0
    %508 = vmatmul.mubr.f32.gmra.mrb[0].mxu0 %v441
    %v509 = vpop.f32.mrb[0].mxu0
    %v510 = vadd.f32 0.0, %v509
    %v511 = vpop.f32.mrb[0].mxu0
    %512 = vmatprep.mubr.f32.mxu0 0.0
    %513 = vmatmul.mubr.f32.gmra.mrb[0].mxu0 %v442
    %v514 = vpop.f32.mrb[0].mxu0
    %v515 = vadd.f32 0.0, %v514
    %v516 = vpop.f32.mrb[0].mxu0
    %517 = vdwg.mxu0
    %v518 = vmul.f32 %v267, %v351
    %v519 = vmul.f32 %v268, %v356
    %v520 = vmul.f32 %v271, 0.5
    %v521 = vmul.f32 %v272, 0.5
    %v522 = vmul.f32 %v520, %v510
    %v523 = vmul.f32 %v521, %v515
    %v524 = vadd.f32 %v518, %v522
    %v525 = vadd.f32 %v519, %v523
    %v527 = vsel %vm181, %v524, 0
    %v530 = vsel %vm181, %v525, 0
    %532 = vmatprep.subr.mxu0 0.0
    %533 = vmatpush1.msra.mxu0 %v63
    %534 = vmatprep.subr.mxu0 0.0
    %535 = vmatpush1.msra.mxu0 %v64
    %536 = vmatprep.subr.mxu0 0.0
    %537 = vmatpush1.msra.mxu0 %v65
    %538 = vmatprep.subr.mxu0 0.0
    %539 = vmatpush1.msra.mxu0 %v66
    %540 = vmatprep.subr.mxu0 0.0
    %541 = vmatpush1.msra.mxu0 0.0
    %542 = vmatprep.subr.mxu0 0.0
    %543 = vmatpush1.msra.mxu0 0.0
    %544 = vmatprep.subr.mxu0 0.0
    %545 = vmatpush1.msra.mxu0 0.0
    %546 = vmatprep.subr.mxu0 0.0
    %547 = vmatpush1.msra.mxu0 0.0
    %548 = vmatprep.subr.mxu0 0.0
    %549 = vmatpush1.msra.mxu0 0.0
    %550 = vmatprep.subr.mxu0 0.0
    %551 = vmatpush1.msra.mxu0 0.0
    %552 = vmatprep.subr.mxu0 0.0
    %553 = vmatpush1.msra.mxu0 0.0
    %554 = vmatprep.subr.mxu0 0.0
    %555 = vmatpush1.msra.mxu0 0.0
    %556 = vmatprep.subr.mxu0 0.0
    %557 = vmatpush1.msra.mxu0 0.0
    %558 = vmatprep.subr.mxu0 0.0
    %559 = vmatpush1.msra.mxu0 0.0
    %560 = vmatprep.subr.mxu0 0.0
    %561 = vmatpush1.msra.mxu0 0.0
    %562 = vmatprep.subr.mxu0 0.0
    %563 = vmatpush1.msra.mxu0 0.0
    %564 = vmatprep.subr.mxu0 0.0
    %565 = vmatpush1.msra.mxu0 0.0
    %566 = vmatprep.subr.mxu0 0.0
    %567 = vmatpush1.msra.mxu0 0.0
    %568 = vmatprep.subr.mxu0 0.0
    %569 = vmatpush1.msra.mxu0 0.0
    %570 = vmatprep.subr.mxu0 0.0
    %571 = vmatpush1.msra.mxu0 0.0
    %572 = vmatprep.subr.mxu0 0.0
    %573 = vmatpush1.msra.mxu0 0.0
    %574 = vmatprep.subr.mxu0 0.0
    %575 = vmatpush1.msra.mxu0 0.0
    %576 = vmatprep.subr.mxu0 0.0
    %577 = vmatpush1.msra.mxu0 0.0
    %578 = vmatprep.subr.mxu0 0.0
    %579 = vmatpush1.msra.mxu0 0.0
    %580 = vmatprep.subr.mxu0 0.0
    %581 = vmatpush1.msra.mxu0 0.0
    %582 = vmatprep.subr.mxu0 0.0
    %583 = vmatpush1.msra.mxu0 0.0
    %584 = vmatprep.subr.mxu0 0.0
    %585 = vmatpush1.msra.mxu0 0.0
    %586 = vmatprep.subr.mxu0 0.0
    %587 = vmatpush1.msra.mxu0 0.0
    %588 = vmatprep.subr.mxu0 0.0
    %589 = vmatpush1.msra.mxu0 0.0
    %590 = vmatprep.subr.mxu0 0.0
    %591 = vmatpush1.msra.mxu0 0.0
    %592 = vmatprep.subr.mxu0 0.0
    %593 = vmatpush1.msra.mxu0 0.0
    %594 = vmatprep.subr.mxu0 0.0
    %595 = vmatpush1.msra.mxu0 0.0
    %596 = vmatprep.mubr.f32.mxu0 0.0
    %597 = vmatmul.mubr.f32.gmra.mrb[0].mxu0 %v527
    %v598 = vpop.f32.mrb[0].mxu0
    %v599 = vadd.f32 0.0, %v598
    %v600 = vpop.f32.mrb[0].mxu0
    %601 = vmatprep.mubr.f32.mxu0 0.0
    %602 = vmatmul.mubr.f32.gmra.mrb[0].mxu0 %v530
    %v603 = vpop.f32.mrb[0].mxu0
    %v604 = vadd.f32 0.0, %v603
    %v605 = vpop.f32.mrb[0].mxu0
    %606 = vdwg.mxu0
    %607 = vst.msk [vmem:[#allocation7] sm:$0xff] %vm93, %v599
    %608 = vst.msk [vmem:[#allocation7 + $0x8] sm:$0xff] %vm93, %v604
    // Predicated region
    $region18: #{autoencoder_drift_forward.1} parent=1 // pred_check
      _
    $region19: #{autoencoder_drift_forward.1} parent=1 // pred_check_branch
      %610 = sbr.rel (0) target = $region21
    $region20: #{autoencoder_drift_forward.1} parent=1 // pred_region
      %s612 = ssub.s32 256, 256
      %613 = vsyncadd [#allocation4], %s612
      %s614 = sshll.u32 [#allocation7], 4
      %s615 = int_to_ptr.vmem [resolvable:$true] %s614
      %620 = dma.vmem_to_hbm [thread:$0]  %s615, 256, %s2, [#allocation4], 128, 128, 8
    $region21: #{autoencoder_drift_forward.1} parent=1 // pred_fallthru
      _
    // Predicated region
    $region22: #{autoencoder_drift_forward.1} parent=1 // pred_check
      _
    $region23: #{autoencoder_drift_forward.1} parent=1 // pred_check_branch
      %622 = sbr.rel (0) target = $region25
    $region24: #{autoencoder_drift_forward.1} parent=1 // pred_region
      %623 = dma.done [#allocation4], 256
    $region25: #{autoencoder_drift_forward.1} parent=1 // pred_fallthru
      _
    %624 = vsyncpa [#allocation3], 1
    %625 = vsyncpa [#allocation6], 1
    %626 = vsyncpa [#allocation4], 1

</llo_original>
